<compile_context>
chip_gen: v7x
topology: tpu7x:2x2x1
jax: 0.10.0
libtpu: 0.0.40
codegen_flags: <defaults>
</compile_context>

<pallas_src>
import jax
import jax.numpy as jnp
from jax.experimental import pallas as pl
from jax.experimental.pallas import tpu as pltpu

_LANE = 128                             # lane-dense last dim: one full vreg row
_ROW_MULT = 32                          # row multiple covering f32/bf16/int8 sublane tiles
_TARGET_BLOCK_BYTES = 8 * 1024 * 1024   # ~8 MiB per block (dtype-aware rows)
_MIN_BLOCKS = 4                         # >=2 blocks per TensorCore on v7x megacore
_VMEM_LIMIT_BYTES = 48 * 1024 * 1024    # 2 arrays x 2 buffers x 8 MiB = 32 MiB peak


def _relu_kernel(x_ref, o_ref):
    # One compare-select per vreg on the VPU; weak-typed scalar 0 keeps the
    # input dtype (float or int) and avoids a broadcast materialization.
    o_ref[...] = jnp.maximum(x_ref[...], 0)


def _round_up(a: int, m: int) -> int:
    return ((a + m - 1) // m) * m


def _choose_tile_rows(rows: int, itemsize: int) -> int:
    """Balanced, (8,128)-aligned row tile of ~_TARGET_BLOCK_BYTES per block."""
    # Dtype-aware row budget so the block stays at the same byte size.
    budget = max(
        _ROW_MULT,
        (_TARGET_BLOCK_BYTES // (_LANE * itemsize)) // _ROW_MULT * _ROW_MULT,
    )
    # Cap so mid-sized inputs still give >= _MIN_BLOCKS grid steps.
    cap = _round_up(pl.cdiv(rows, _MIN_BLOCKS), _ROW_MULT)
    tile = min(budget, cap)
    # Re-balance: spread rows evenly over the resulting number of blocks so the
    # last (masked) block wastes at most a few rows, not a whole tile.
    num_blocks = pl.cdiv(rows, tile)
    tile = _round_up(pl.cdiv(rows, num_blocks), _ROW_MULT)
    # If a single tile covers everything, use the full extent (always legal).
    return min(tile, rows)


def pallas_relu(x: jax.Array, *, donate: bool = False) -> jax.Array:
    """ReLU via a tiled, pipelined Pallas TPU kernel. Any shape / numeric dtype.

    donate=True aliases the input and output HBM buffers (in-place ReLU); only
    enable it when the caller donates x, otherwise XLA inserts a copy.
    """
    orig_shape = x.shape
    n = x.size
    if n == 0:
        return x

    itemsize = jnp.dtype(x.dtype).itemsize
    aligned = (n % _LANE) == 0

    # Layout plumbing: flatten to a lane-dense (rows, 128) slab. For aligned
    # sizes this is a free reshape of a contiguous array (no HBM traffic).
    flat = x.reshape(-1)
    if aligned:
        padded_n = n
    else:
        padded_n = _round_up(n, _LANE)
        flat = jnp.pad(flat, (0, padded_n - n))
    rows = padded_n // _LANE
    x2d = flat.reshape(rows, _LANE)

    tile_rows = _choose_tile_rows(rows, itemsize)
    grid = (pl.cdiv(rows, tile_rows),)   # ragged last block: reads clamped, stores masked

    out2d = pl.pallas_call(
        _relu_kernel,
        out_shape=jax.ShapeDtypeStruct((rows, _LANE), x.dtype),
        grid=grid,
        in_specs=[pl.BlockSpec((tile_rows, _LANE), lambda i: (i, 0))],
        out_specs=pl.BlockSpec((tile_rows, _LANE), lambda i: (i, 0)),
        input_output_aliases=({0: 0} if donate else {}),
        compiler_params=pltpu.CompilerParams(
            dimension_semantics=("parallel",),
            vmem_limit_bytes=_VMEM_LIMIT_BYTES,
        ),
        cost_estimate=pl.CostEstimate(
            flops=padded_n,
            transcendentals=0,
            bytes_accessed=2 * padded_n * itemsize,
        ),
    )(x2d)

    if aligned:
        return out2d.reshape(orig_shape)
    return out2d.reshape(-1)[:n].reshape(orig_shape)


class Tudui:
    """JAX/Pallas equivalent of the PyTorch Tudui module (ReLU only).

    ReLU has no parameters, so __init__ has nothing to initialize.
    """

    def __init__(self):
        pass

    def __call__(self, x: jax.Array) -> jax.Array:
        return pallas_relu(x)


if __name__ == "__main__":
    model = Tudui()

    # Exactly mirror the script's tensor: reshape([[1,-0.5],[-1,3]], (-1,1,2,2)).
    # 4 elements -> exercises the ragged (pad + slice) fallback path.
    inp_small = jnp.array([[1.0, -0.5], [-1.0, 3.0]], dtype=jnp.float32)
    inp_small = inp_small.reshape(-1, 1, 2, 2)  # (1, 1, 2, 2), NCHW
    out_small = model(inp_small)
    jax.block_until_ready(out_small)
    assert out_small.shape == inp_small.shape
    assert out_small.dtype == inp_small.dtype
    assert bool(jnp.allclose(out_small, jnp.maximum(inp_small, 0.0)))

    # Small deterministic NCHW input: 2*4*16*16 = 2048 elements -> aligned
    # fast path (no pad, no slice), single-block grid.
    key = jax.random.PRNGKey(0)
    x = jax.random.normal(key, (2, 4, 16, 16), dtype=jnp.float32)
    out = model(x)
    jax.block_until_ready(out)
    assert out.shape == x.shape and out.dtype == x.dtype
    assert bool(jnp.allclose(out, jnp.maximum(x, 0.0)))

    # bf16 variant exercises the dtype-aware row budget on the fast path.
    x_bf16 = x.astype(jnp.bfloat16)
    out_bf16 = model(x_bf16)
    jax.block_until_ready(out_bf16)
    assert out_bf16.dtype == jnp.bfloat16
    assert bool(jnp.allclose(out_bf16, jnp.maximum(x_bf16, 0)))

    # Medium input (4 MiB f32, 8192 rows of 128) -> multi-block pipelined grid
    # (grid of 4 balanced blocks for megacore / pipeline overlap).
    key2 = jax.random.PRNGKey(1)
    y = jax.random.normal(key2, (8, 32, 64, 64), dtype=jnp.float32)
    out_y = model(y)
    jax.block_until_ready(out_y)
    assert bool(jnp.allclose(out_y, jnp.maximum(y, 0.0)))

    # Misaligned size (3*5*7 = 105 elements) -> ragged fallback path again.
    z = jax.random.normal(jax.random.PRNGKey(2), (3, 5, 7), dtype=jnp.float32)
    out_z = model(z)
    jax.block_until_ready(out_z)
    assert bool(jnp.allclose(out_z, jnp.maximum(z, 0.0)))

    print("KERNEL_OK")
</pallas_src>

<mosaic_0001>
module attributes {stable_mosaic.version = 11 : i64} {
  func.func @_relu_kernel(%arg0: i32, %arg1: memref<1x128xf32, #tpu.memory_space<vmem>>, %arg2: memref<1x128xf32, #tpu.memory_space<vmem>>) attributes {dimension_semantics = [#tpu.dimension_semantics<parallel>], iteration_bounds = array<i64: 1>, scalar_prefetch = 0 : i64, scratch_operands = 0 : i64, tpu.core_type = #tpu.core_type<tc>, window_params = [{transform_indices = @transform_0, window_bounds = array<i64: 1, 128>}, {transform_indices = @transform_1, window_bounds = array<i64: 1, 128>}]} {
    %c0 = arith.constant 0 : index
    %c0_0 = arith.constant 0 : index
    %0 = vector.load %arg1[%c0, %c0_0] : memref<1x128xf32, #tpu.memory_space<vmem>>, vector<1x128xf32>
    %cst = arith.constant 0.000000e+00 : f32
    %1 = vector.broadcast %cst : f32 to vector<1x128xf32>
    %2 = arith.maximumf %0, %1 : vector<1x128xf32>
    %c0_1 = arith.constant 0 : index
    %c0_2 = arith.constant 0 : index
    %3 = vector.load %arg2[%c0_1, %c0_2] : memref<1x128xf32, #tpu.memory_space<vmem>>, vector<1x128xf32>
    tpu.vector_store %arg2[%c0_1, %c0_2], %2 {strides = array<i32>} : memref<1x128xf32, #tpu.memory_space<vmem>>, vector<1x128xf32>,
    return
  }
  func.func @transform_0(%arg0: i32) -> (i32, i32) {
    %c0_i32 = arith.constant 0 : i32
    %c0_i32_0 = arith.constant 0 : i32
    return %arg0, %c0_i32 : i32, i32
  }
  func.func @transform_1(%arg0: i32) -> (i32, i32) {
    %c0_i32 = arith.constant 0 : i32
    %c0_i32_0 = arith.constant 0 : i32
    return %arg0, %c0_i32 : i32, i32
  }
}

</mosaic_0001>

<llo_original>
// kernel: tpu_custom_call.1
$region0: #{tpu_custom_call.1}
  #allocation0 [shape = 'u32[]', space=smem, size = 0x4, offset = 0x4, fixed_abs, tag = 'smem constant byte address 0x4 - core index']
  #allocation1 [shape = 'u32[144,128]{1,0:T(1,128)}', space=vmem, size = 0x12000, scoped, tag = 'internal scratch']
  %s0 = inlined_call_operand.hbm [shape: f32[1,128], index: 0, kind: input, shape index: {}]
  %s1 = inlined_call_operand.hbm [shape: f32[1,128], index: 1, kind: output, shape index: {}]
  %s2 = sld [smem:[#allocation0]]
  $region18: #{tpu_custom_call.1} parent=0
    _
  %s4 = ssub.s32 1, %s2
  %s5 = scalar_select 0, %s4, %s2
  $region1: #{tpu_custom_call.1} parent=0
    #allocation2 [shape = 'u8[512]{0}', space=vmem, size = 0x400, scoped, tag = 'input window, operand 0, single buffered']
    #allocation3 [shape = 's32[1]{0}', space=sflag, size = 0x4, scoped, tag = 'scoped memory for tpu_custom_call.1']
    #allocation4 [shape = 's32[1]{0}', space=sflag, size = 0x4, scoped, tag = 'scoped memory for tpu_custom_call.1']
    #allocation5 [shape = 'u8[512]{0}', space=vmem, size = 0x400, scoped, tag = 'output window, operand 0, single buffered']
    %6 = vsyncpa [#allocation3], 0
    %7 = vsyncpa [#allocation4], 0
    // Predicated region
    $region2: #{tpu_custom_call.1} parent=1 // pred_check
      _
    $region3: #{tpu_custom_call.1} parent=1 // pred_check_branch
      %9 = sbr.rel (0) target = $region5
    $region4: #{tpu_custom_call.1} parent=1 // pred_region
      %s11 = ssub.s32 16, 16
      %12 = vsyncadd [#allocation3], %s11
      %s14 = sshll.u32 [#allocation2], 4
      %s15 = int_to_ptr.vmem [resolvable:$true] %s14
      %17 = dma.hbm_to_vmem [thread:$0]  %s0, 16, %s15, [#allocation3]
    $region5: #{tpu_custom_call.1} parent=1 // pred_fallthru
      _
    // Predicated region
    $region6: #{tpu_custom_call.1} parent=1 // pred_check
      _
    $region7: #{tpu_custom_call.1} parent=1 // pred_check_branch
      %19 = sbr.rel (0) target = $region9
    $region8: #{tpu_custom_call.1} parent=1 // pred_region
      %20 = dma.done [#allocation3], 16
    $region9: #{tpu_custom_call.1} parent=1 // pred_fallthru
      _
    %v21 = vld [vmem:[#allocation2] sm:$0x1]
    %v22 = vmax.f32 %v21, 0.0
    %23 = vst [vmem:[#allocation5] sm:$0x1] %v22
    // Predicated region
    $region10: #{tpu_custom_call.1} parent=1 // pred_check
      _
    $region11: #{tpu_custom_call.1} parent=1 // pred_check_branch
      %25 = sbr.rel (0) target = $region13
    $region12: #{tpu_custom_call.1} parent=1 // pred_region
      %s27 = ssub.s32 16, 16
      %28 = vsyncadd [#allocation4], %s27
      %s30 = sshll.u32 [#allocation5], 4
      %s31 = int_to_ptr.vmem [resolvable:$true] %s30
      %33 = dma.vmem_to_hbm [thread:$0]  %s31, 16, %s1, [#allocation4]
    $region13: #{tpu_custom_call.1} parent=1 // pred_fallthru
      _
    // Predicated region
    $region14: #{tpu_custom_call.1} parent=1 // pred_check
      _
    $region15: #{tpu_custom_call.1} parent=1 // pred_check_branch
      %35 = sbr.rel (0) target = $region17
    $region16: #{tpu_custom_call.1} parent=1 // pred_region
      %36 = dma.done [#allocation4], 16
    $region17: #{tpu_custom_call.1} parent=1 // pred_fallthru
      _
    %37 = vsyncpa [#allocation3], 1
    %38 = vsyncpa [#allocation4], 1

</llo_original>
